<compile_context>
chip_gen: v6e
topology: v6e:2x2x1
jax: 0.10.0
libtpu: 0.0.40
codegen_flags: <defaults>
</compile_context>

<pallas_src>
import jax
import jax.numpy as jnp
from jax.experimental import pallas as pl
from jax.experimental.pallas import tpu as pltpu


_VMEM_LIMIT_BYTES = 48 * 1024 * 1024    # < v7x 64 MiB physical; > v5e/v6e scoped defaults
_BLOCK_BUDGET_BYTES = 32 * 1024 * 1024  # cap on double-buffered (x-in + out) block footprint


def _round_up(a, b):
    return (a + b - 1) // b * b


def low_threshold_dc(x, h, l, patch_size=2):
    """Pallas implementation of LowThresholdDC.forward.

    x: (B, C, H, W) NCHW, same as the PyTorch module.
    h, l: (C * patch_size**2,) learnable per-(channel, quadrant) scales.
    """
    B, C, H, W = x.shape
    p = patch_size
    assert H % p == 0 and W % p == 0
    w1, w2 = H // p, W // p
    PP = p * p
    BC = B * C

    # (B, C, H, W) -> (B*C, H, W): metadata-only reshape, no HBM transpose.
    x3 = x.reshape(BC, H, W)

    # Per-row (= per (b, c)) quadrant scales, kept in f32 for precision.
    hf = jnp.tile(jnp.asarray(h, jnp.float32).reshape(C, PP), (B, 1))   # (BC, PP)
    lf = jnp.tile(jnp.asarray(l, jnp.float32).reshape(C, PP), (B, 1))   # (BC, PP)

    # --- Row-block size derived from the VMEM budget. ---------------------
    itemsize = jnp.dtype(x.dtype).itemsize
    # VMEM bytes of one row of a block, including (8, 128) tile padding.
    row_vmem_bytes = _round_up(H, 8) * _round_up(W, 128) * max(int(itemsize), 4)
    max_rows = max(1, _BLOCK_BUDGET_BYTES // (4 * row_vmem_bytes))
    row_block = min(BC, max_rows)
    # Prefer >= 2 grid steps when the whole array would fit in one block so
    # v7x's 2 TensorCores can both be used (neutral on v5e/v6e).
    if row_block == BC and BC >= 2:
        row_block = pl.cdiv(BC, 2)
    grid = pl.cdiv(BC, row_block)

    # Pad the (tiny) scale tables so the in-kernel dynamic row slice of the
    # VMEM-resident copy never reads out of bounds on a partial last block.
    n_pad = grid * row_block
    if n_pad > BC:
        hf = jnp.pad(hf, ((0, n_pad - BC), (0, 0)))
        lf = jnp.pad(lf, ((0, n_pad - BC), (0, 0)))

    inv_area = 1.0 / float(w1 * w2)

    def kernel(x_ref, h_ref, l_ref, o_ref):
        r0 = pl.program_id(0) * row_block
        if row_block % 8 == 0:
            r0 = pl.multiple_of(r0, 8)
        # Resident h/l tables: slice out this block's rows once.
        hrow = h_ref[pl.ds(r0, row_block), :]          # (rows, p*p) f32
        lrow = l_ref[pl.ds(r0, row_block), :]          # (rows, p*p) f32
        for p1 in range(p):
            for p2 in range(p):
                q = p1 * p + p2
                quad = x_ref[:, p1 * w1:(p1 + 1) * w1, p2 * w2:(p2 + 1) * w2]
                qf = quad.astype(jnp.float32)
                # AdaptiveAvgPool2d((1,1)) over the quadrant, f32 accumulate.
                s = jnp.sum(qf, axis=2, keepdims=True)   # lane reduce
                s = jnp.sum(s, axis=1, keepdims=True)    # sublane reduce
                low = s * inv_area                       # (rows, 1, 1)
                hh = hrow[:, q:q + 1][:, :, None]        # (rows, 1, 1)
                ll = lrow[:, q:q + 1][:, :, None]        # (rows, 1, 1)
                out = (qf - low) * hh + low * ll
                o_ref[:, p1 * w1:(p1 + 1) * w1, p2 * w2:(p2 + 1) * w2] = (
                    out.astype(o_ref.dtype)
                )

    n_elems = BC * H * W
    cost = pl.CostEstimate(
        flops=int(6 * n_elems),
        transcendentals=0,
        bytes_accessed=int(2 * n_elems * itemsize + 2 * n_pad * PP * 4),
    )

    out = pl.pallas_call(
        kernel,
        out_shape=jax.ShapeDtypeStruct((BC, H, W), x.dtype),
        grid=(grid,),
        in_specs=[
            pl.BlockSpec((row_block, H, W), lambda i: (i, 0, 0)),
            # h / l: same block index every step -> fetched once, VMEM-resident.
            pl.BlockSpec((n_pad, PP), lambda i: (0, 0)),
            pl.BlockSpec((n_pad, PP), lambda i: (0, 0)),
        ],
        out_specs=pl.BlockSpec((row_block, H, W), lambda i: (i, 0, 0)),
        compiler_params=pltpu.CompilerParams(
            dimension_semantics=("parallel",),
            vmem_limit_bytes=_VMEM_LIMIT_BYTES,
        ),
        cost_estimate=cost,
    )(x3, hf, lf)

    # (B*C, H, W) -> (B, C, H, W): metadata-only reshape.
    return out.reshape(B, C, H, W)


def low_threshold_dc_ref(x, h, l, patch_size=2):
    """Pure-JAX reference mirroring the PyTorch forward semantics."""
    B, C, H, W = x.shape
    p = patch_size
    w1, w2 = H // p, W // p
    CH = C * p * p
    px = (
        x.reshape(B, C, p, w1, p, w2)
        .transpose(0, 1, 2, 4, 3, 5)
        .reshape(B, CH, w1, w2)
    )
    low = jnp.mean(px, axis=(2, 3), keepdims=True)
    high = (px - low) * h[None, :, None, None]
    out = high + low * l[None, :, None, None]
    out = (
        out.reshape(B, C, p, p, w1, w2)
        .transpose(0, 1, 2, 4, 3, 5)
        .reshape(B, C, H, W)
    )
    return out


if __name__ == "__main__":
    key = jax.random.PRNGKey(0)
    kx, kh, kl = jax.random.split(key, 3)

    B, C, H, W = 2, 4, 16, 16
    patch_size = 2
    CH = C * patch_size ** 2

    x = jax.random.normal(kx, (B, C, H, W), dtype=jnp.float32)
    # Module __init__ uses torch.zeros for h/l; use deterministic nonzero
    # values here so the kernel math is actually exercised.
    h = jax.random.normal(kh, (CH,), dtype=jnp.float32) * 0.1
    l = jax.random.normal(kl, (CH,), dtype=jnp.float32) * 0.1

    out = low_threshold_dc(x, h, l, patch_size=patch_size)
    out = jax.block_until_ready(out)

    ref = low_threshold_dc_ref(x, h, l, patch_size=patch_size)
    assert out.shape == (B, C, H, W)
    assert jnp.allclose(out, ref, atol=1e-5, rtol=1e-5)

    print("KERNEL_OK")
</pallas_src>

<mosaic_0001>
module attributes {stable_mosaic.version = 11 : i64} {
  func.func @kernel(%arg0: i32, %arg1: memref<4x16x16xf32, #tpu.memory_space<vmem>>, %arg2: memref<8x4xf32, #tpu.memory_space<vmem>>, %arg3: memref<8x4xf32, #tpu.memory_space<vmem>>, %arg4: memref<4x16x16xf32, #tpu.memory_space<vmem>>) attributes {dimension_semantics = [#tpu.dimension_semantics<parallel>], iteration_bounds = array<i64: 2>, scalar_prefetch = 0 : i64, scratch_operands = 0 : i64, tpu.core_type = #tpu.core_type<tc>, window_params = [{transform_indices = @transform_0, window_bounds = array<i64: 4, 16, 16>}, {pipeline_mode = #tpu.pipeline_mode<synchronous>, transform_indices = @transform_1, window_bounds = array<i64: 8, 4>}, {pipeline_mode = #tpu.pipeline_mode<synchronous>, transform_indices = @transform_2, window_bounds = array<i64: 8, 4>}, {transform_indices = @transform_3, window_bounds = array<i64: 4, 16, 16>}]} {
    %c4_i32 = arith.constant 4 : i32
    %0 = arith.muli %arg0, %c4_i32 : i32
    %1 = arith.index_cast %0 : i32 to index
    %c0 = arith.constant 0 : index
    %2 = vector.load %arg2[%1, %c0] : memref<8x4xf32, #tpu.memory_space<vmem>>, vector<4x4xf32>
    %3 = arith.index_cast %0 : i32 to index
    %c0_0 = arith.constant 0 : index
    %4 = vector.load %arg3[%3, %c0_0] : memref<8x4xf32, #tpu.memory_space<vmem>>, vector<4x4xf32>
    %c0_1 = arith.constant 0 : index
    %c0_2 = arith.constant 0 : index
    %c0_3 = arith.constant 0 : index
    %5 = vector.load %arg1[%c0_1, %c0_2, %c0_3] : memref<4x16x16xf32, #tpu.memory_space<vmem>>, vector<4x8x8xf32>
    %cst = arith.constant dense<0.000000e+00> : vector<4x8xf32>
    %6 = vector.multi_reduction <add>, %5, %cst [2] : vector<4x8x8xf32> to vector<4x8xf32>
    %7 = vector.shape_cast %6 : vector<4x8xf32> to vector<4x8x1xf32>
    %cst_4 = arith.constant dense<0.000000e+00> : vector<4x1xf32>
    %8 = vector.multi_reduction <add>, %7, %cst_4 [1] : vector<4x8x1xf32> to vector<4x1xf32>
    %9 = vector.shape_cast %8 : vector<4x1xf32> to vector<4x1x1xf32>
    %cst_5 = arith.constant 1.562500e-02 : f32
    %10 = vector.broadcast %cst_5 : f32 to vector<4x1x1xf32>
    %11 = arith.mulf %9, %10 : vector<4x1x1xf32>
    %12 = vector.extract_strided_slice %2 {offsets = [0, 0], sizes = [4, 1], strides = [1, 1]} : vector<4x4xf32> to vector<4x1xf32>
    %13 = vector.shape_cast %12 : vector<4x1xf32> to vector<4x1x1xf32>
    %14 = vector.extract_strided_slice %4 {offsets = [0, 0], sizes = [4, 1], strides = [1, 1]} : vector<4x4xf32> to vector<4x1xf32>
    %15 = vector.shape_cast %14 : vector<4x1xf32> to vector<4x1x1xf32>
    %16 = vector.broadcast %11 : vector<4x1x1xf32> to vector<4x8x8xf32>
    %17 = arith.subf %5, %16 : vector<4x8x8xf32>
    %18 = vector.broadcast %13 : vector<4x1x1xf32> to vector<4x8x8xf32>
    %19 = arith.mulf %17, %18 : vector<4x8x8xf32>
    %20 = arith.mulf %11, %15 : vector<4x1x1xf32>
    %21 = vector.broadcast %20 : vector<4x1x1xf32> to vector<4x8x8xf32>
    %22 = arith.addf %19, %21 : vector<4x8x8xf32>
    %c0_6 = arith.constant 0 : index
    %c0_7 = arith.constant 0 : index
    %c0_8 = arith.constant 0 : index
    %23 = vector.load %arg4[%c0_6, %c0_7, %c0_8] : memref<4x16x16xf32, #tpu.memory_space<vmem>>, vector<4x8x8xf32>
    tpu.vector_store %arg4[%c0_6, %c0_7, %c0_8], %22 {strides = array<i32>} : memref<4x16x16xf32, #tpu.memory_space<vmem>>, vector<4x8x8xf32>,
    %c0_9 = arith.constant 0 : index
    %c0_10 = arith.constant 0 : index
    %c8 = arith.constant 8 : index
    %24 = vector.load %arg1[%c0_9, %c0_10, %c8] : memref<4x16x16xf32, #tpu.memory_space<vmem>>, vector<4x8x8xf32>
    %cst_11 = arith.constant dense<0.000000e+00> : vector<4x8xf32>
    %25 = vector.multi_reduction <add>, %24, %cst_11 [2] : vector<4x8x8xf32> to vector<4x8xf32>
    %26 = vector.shape_cast %25 : vector<4x8xf32> to vector<4x8x1xf32>
    %cst_12 = arith.constant dense<0.000000e+00> : vector<4x1xf32>
    %27 = vector.multi_reduction <add>, %26, %cst_12 [1] : vector<4x8x1xf32> to vector<4x1xf32>
    %28 = vector.shape_cast %27 : vector<4x1xf32> to vector<4x1x1xf32>
    %cst_13 = arith.constant 1.562500e-02 : f32
    %29 = vector.broadcast %cst_13 : f32 to vector<4x1x1xf32>
    %30 = arith.mulf %28, %29 : vector<4x1x1xf32>
    %31 = vector.extract_strided_slice %2 {offsets = [0, 1], sizes = [4, 1], strides = [1, 1]} : vector<4x4xf32> to vector<4x1xf32>
    %32 = vector.shape_cast %31 : vector<4x1xf32> to vector<4x1x1xf32>
    %33 = vector.extract_strided_slice %4 {offsets = [0, 1], sizes = [4, 1], strides = [1, 1]} : vector<4x4xf32> to vector<4x1xf32>
    %34 = vector.shape_cast %33 : vector<4x1xf32> to vector<4x1x1xf32>
    %35 = vector.broadcast %30 : vector<4x1x1xf32> to vector<4x8x8xf32>
    %36 = arith.subf %24, %35 : vector<4x8x8xf32>
    %37 = vector.broadcast %32 : vector<4x1x1xf32> to vector<4x8x8xf32>
    %38 = arith.mulf %36, %37 : vector<4x8x8xf32>
    %39 = arith.mulf %30, %34 : vector<4x1x1xf32>
    %40 = vector.broadcast %39 : vector<4x1x1xf32> to vector<4x8x8xf32>
    %41 = arith.addf %38, %40 : vector<4x8x8xf32>
    %c0_14 = arith.constant 0 : index
    %c0_15 = arith.constant 0 : index
    %c8_16 = arith.constant 8 : index
    %42 = vector.load %arg4[%c0_14, %c0_15, %c8_16] : memref<4x16x16xf32, #tpu.memory_space<vmem>>, vector<4x8x8xf32>
    tpu.vector_store %arg4[%c0_14, %c0_15, %c8_16], %41 {strides = array<i32>} : memref<4x16x16xf32, #tpu.memory_space<vmem>>, vector<4x8x8xf32>,
    %c0_17 = arith.constant 0 : index
    %c8_18 = arith.constant 8 : index
    %c0_19 = arith.constant 0 : index
    %43 = vector.load %arg1[%c0_17, %c8_18, %c0_19] : memref<4x16x16xf32, #tpu.memory_space<vmem>>, vector<4x8x8xf32>
    %cst_20 = arith.constant dense<0.000000e+00> : vector<4x8xf32>
    %44 = vector.multi_reduction <add>, %43, %cst_20 [2] : vector<4x8x8xf32> to vector<4x8xf32>
    %45 = vector.shape_cast %44 : vector<4x8xf32> to vector<4x8x1xf32>
    %cst_21 = arith.constant dense<0.000000e+00> : vector<4x1xf32>
    %46 = vector.multi_reduction <add>, %45, %cst_21 [1] : vector<4x8x1xf32> to vector<4x1xf32>
    %47 = vector.shape_cast %46 : vector<4x1xf32> to vector<4x1x1xf32>
    %cst_22 = arith.constant 1.562500e-02 : f32
    %48 = vector.broadcast %cst_22 : f32 to vector<4x1x1xf32>
    %49 = arith.mulf %47, %48 : vector<4x1x1xf32>
    %50 = vector.extract_strided_slice %2 {offsets = [0, 2], sizes = [4, 1], strides = [1, 1]} : vector<4x4xf32> to vector<4x1xf32>
    %51 = vector.shape_cast %50 : vector<4x1xf32> to vector<4x1x1xf32>
    %52 = vector.extract_strided_slice %4 {offsets = [0, 2], sizes = [4, 1], strides = [1, 1]} : vector<4x4xf32> to vector<4x1xf32>
    %53 = vector.shape_cast %52 : vector<4x1xf32> to vector<4x1x1xf32>
    %54 = vector.broadcast %49 : vector<4x1x1xf32> to vector<4x8x8xf32>
    %55 = arith.subf %43, %54 : vector<4x8x8xf32>
    %56 = vector.broadcast %51 : vector<4x1x1xf32> to vector<4x8x8xf32>
    %57 = arith.mulf %55, %56 : vector<4x8x8xf32>
    %58 = arith.mulf %49, %53 : vector<4x1x1xf32>
    %59 = vector.broadcast %58 : vector<4x1x1xf32> to vector<4x8x8xf32>
    %60 = arith.addf %57, %59 : vector<4x8x8xf32>
    %c0_23 = arith.constant 0 : index
    %c8_24 = arith.constant 8 : index
    %c0_25 = arith.constant 0 : index
    %61 = vector.load %arg4[%c0_23, %c8_24, %c0_25] : memref<4x16x16xf32, #tpu.memory_space<vmem>>, vector<4x8x8xf32>
    tpu.vector_store %arg4[%c0_23, %c8_24, %c0_25], %60 {strides = array<i32>} : memref<4x16x16xf32, #tpu.memory_space<vmem>>, vector<4x8x8xf32>,
    %c0_26 = arith.constant 0 : index
    %c8_27 = arith.constant 8 : index
    %c8_28 = arith.constant 8 : index
    %62 = vector.load %arg1[%c0_26, %c8_27, %c8_28] : memref<4x16x16xf32, #tpu.memory_space<vmem>>, vector<4x8x8xf32>
    %cst_29 = arith.constant dense<0.000000e+00> : vector<4x8xf32>
    %63 = vector.multi_reduction <add>, %62, %cst_29 [2] : vector<4x8x8xf32> to vector<4x8xf32>
    %64 = vector.shape_cast %63 : vector<4x8xf32> to vector<4x8x1xf32>
    %cst_30 = arith.constant dense<0.000000e+00> : vector<4x1xf32>
    %65 = vector.multi_reduction <add>, %64, %cst_30 [1] : vector<4x8x1xf32> to vector<4x1xf32>
    %66 = vector.shape_cast %65 : vector<4x1xf32> to vector<4x1x1xf32>
    %cst_31 = arith.constant 1.562500e-02 : f32
    %67 = vector.broadcast %cst_31 : f32 to vector<4x1x1xf32>
    %68 = arith.mulf %66, %67 : vector<4x1x1xf32>
    %69 = vector.extract_strided_slice %2 {offsets = [0, 3], sizes = [4, 1], strides = [1, 1]} : vector<4x4xf32> to vector<4x1xf32>
    %70 = vector.shape_cast %69 : vector<4x1xf32> to vector<4x1x1xf32>
    %71 = vector.extract_strided_slice %4 {offsets = [0, 3], sizes = [4, 1], strides = [1, 1]} : vector<4x4xf32> to vector<4x1xf32>
    %72 = vector.shape_cast %71 : vector<4x1xf32> to vector<4x1x1xf32>
    %73 = vector.broadcast %68 : vector<4x1x1xf32> to vector<4x8x8xf32>
    %74 = arith.subf %62, %73 : vector<4x8x8xf32>
    %75 = vector.broadcast %70 : vector<4x1x1xf32> to vector<4x8x8xf32>
    %76 = arith.mulf %74, %75 : vector<4x8x8xf32>
    %77 = arith.mulf %68, %72 : vector<4x1x1xf32>
    %78 = vector.broadcast %77 : vector<4x1x1xf32> to vector<4x8x8xf32>
    %79 = arith.addf %76, %78 : vector<4x8x8xf32>
    %c0_32 = arith.constant 0 : index
    %c8_33 = arith.constant 8 : index
    %c8_34 = arith.constant 8 : index
    %80 = vector.load %arg4[%c0_32, %c8_33, %c8_34] : memref<4x16x16xf32, #tpu.memory_space<vmem>>, vector<4x8x8xf32>
    tpu.vector_store %arg4[%c0_32, %c8_33, %c8_34], %79 {strides = array<i32>} : memref<4x16x16xf32, #tpu.memory_space<vmem>>, vector<4x8x8xf32>,
    return
  }
  func.func @transform_0(%arg0: i32) -> (i32, i32, i32) {
    %c0_i32 = arith.constant 0 : i32
    %c0_i32_0 = arith.constant 0 : i32
    %c0_i32_1 = arith.constant 0 : i32
    return %arg0, %c0_i32, %c0_i32_0 : i32, i32, i32
  }
  func.func @transform_1(%arg0: i32) -> (i32, i32) {
    %c0_i32 = arith.constant 0 : i32
    %c0_i32_0 = arith.constant 0 : i32
    %c0_i32_1 = arith.constant 0 : i32
    return %c0_i32, %c0_i32_0 : i32, i32
  }
  func.func @transform_2(%arg0: i32) -> (i32, i32) {
    %c0_i32 = arith.constant 0 : i32
    %c0_i32_0 = arith.constant 0 : i32
    %c0_i32_1 = arith.constant 0 : i32
    return %c0_i32, %c0_i32_0 : i32, i32
  }
  func.func @transform_3(%arg0: i32) -> (i32, i32, i32) {
    %c0_i32 = arith.constant 0 : i32
    %c0_i32_0 = arith.constant 0 : i32
    %c0_i32_1 = arith.constant 0 : i32
    return %arg0, %c0_i32, %c0_i32_0 : i32, i32, i32
  }
}

</mosaic_0001>

<llo_original>
// kernel: tpu_custom_call.1
$region0: #{tpu_custom_call.1}
  #allocation0 [shape = 'u32[]', space=smem, size = 0x4, offset = 0x4, fixed_abs, tag = 'smem constant byte address 0x4 - core index']
  #allocation1 [shape = 'u32[144,128]{1,0:T(1,128)}', space=vmem, size = 0x12000, scoped, tag = 'internal scratch']
  %s0 = inlined_call_operand.hbm [shape: f32[8,16,16], index: 0, kind: input, shape index: {}]
  %s1 = inlined_call_operand.vmem [shape: f32[8,4], index: 1, kind: input, shape index: {}]
  %s2 = inlined_call_operand.vmem [shape: f32[8,4], index: 2, kind: input, shape index: {}]
  %s3 = inlined_call_operand.hbm [shape: f32[8,16,16], index: 3, kind: output, shape index: {}]
  %s4 = sld [smem:[#allocation0]]
  $region49: #{tpu_custom_call.1} parent=0
    _
  %s6 = ssub.s32 1, %s4
  %s7 = scalar_select 0, %s6, %s4
  $region1: #{tpu_custom_call.1} parent=0
    #allocation2 [shape = 'u8[65536]{0}', space=vmem, size = 0x10000, scoped, tag = 'input window, operand 0']
    #allocation3 [shape = 's32[2]{0}', space=sflag, size = 0x8, scoped, tag = 'scoped memory for tpu_custom_call.1']
    #allocation4 [shape = 's32[2]{0}', space=sflag, size = 0x8, scoped, tag = 'scoped memory for tpu_custom_call.1']
    #allocation5 [shape = 'u8[65536]{0}', space=vmem, size = 0x10000, scoped, tag = 'output window, operand 0']
    %8 = vsyncpa [#allocation3], 0
    %s9 = scalar_lea.sflag [#allocation3], 1
    %10 = vsyncpa %s9, 0
    %11 = vsyncpa [#allocation4], 0
    %s12 = scalar_lea.sflag [#allocation4], 1
    %13 = vsyncpa %s12, 0
    loop: start=0, step=1, limit=4
    $region2: #{tpu_custom_call.1} parent=1 // loop_pre_header
      _
    $region3: #{tpu_custom_call.1} parent=1 // loop_header
      %s15 = sphi 0, %s19
      %p16 = scmp.ge.s32.totalorder %s15, 4
      %s25 = sphi 0, %s27
      %s28 = sphi 0, %s25
      %s29 = sphi 0, %s28
      %s45 = sphi 0, %s29
      %s49 = sphi 0, %s49
      %s51 = sphi 0, %s49
      %s52 = sphi 0, %s51
      %s66 = sphi 0, %s52
      %s70 = sphi 0, %s70
      %s72 = sphi 0, %s70
      %s73 = sphi 0, %s72
      %s87 = sphi 0, %s73
      %s93 = sphi 0, %s95
      %s96 = sphi 0, %s93
      %s97 = sphi 0, %s96
      %s113 = sphi 0, %s97
    $region4: #{tpu_custom_call.1} parent=1 // loop_header_branch
      %18 = sbr.rel (%p16) target = $region8
    $region5: #{tpu_custom_call.1} parent=1 // loop_body
      %s20 = ssub.s32 %s15, 1
      %s21 = ssub.s32 %s15, 2
      %s22 = sadd.s32 %s15, 1
      %s23 = ssub.s32 %s15, %s22
      %p24 = scmp.eq.s32.totalorder %s23, 0
      %s26 = sadd.s32 %s25, 1
      %s27 = scalar_select %p24, %s25, %s26
      %p30 = pneg %p24
      %p31 = scmp.eq.s32.totalorder %s15, 1
      %p32 = por %p30, %p31
      %p33 = scmp.ne.s32.totalorder %s25, %s28
      %p34 = scmp.eq.s32.totalorder %s15, 0
      %p35 = por %p33, %p34
      %p36 = scmp.ne.s32.totalorder %s25, %s28
      %p37 = scmp.eq.s32.totalorder %s20, 1
      %p38 = por %p36, %p37
      %p39 = scmp.ne.s32.totalorder %s28, %s29
      %p40 = scmp.eq.s32.totalorder %s20, 0
      %p41 = por %p39, %p40
      %p42 = scmp.ne.s32.totalorder %s28, %s29
      %p43 = scmp.eq.s32.totalorder %s21, 1
      %p44 = por %p42, %p43
      %p46 = scmp.ne.s32.totalorder %s29, %s45
      %p47 = scmp.eq.s32.totalorder %s21, 0
      %p48 = por %p46, %p47
      %s50 = sadd.s32 %s49, 1
      %p53 = scmp.eq.s32.totalorder %s15, 1
      %p54 = scmp.ne.s32.totalorder %s49, %s51
      %p55 = scmp.eq.s32.totalorder %s15, 0
      %p56 = por %p54, %p55
      %p57 = scmp.ne.s32.totalorder %s49, %s51
      %p58 = scmp.eq.s32.totalorder %s20, 1
      %p59 = por %p57, %p58
      %p60 = scmp.ne.s32.totalorder %s51, %s52
      %p61 = scmp.eq.s32.totalorder %s20, 0
      %p62 = por %p60, %p61
      %p63 = scmp.ne.s32.totalorder %s51, %s52
      %p64 = scmp.eq.s32.totalorder %s21, 1
      %p65 = por %p63, %p64
      %p67 = scmp.ne.s32.totalorder %s52, %s66
      %p68 = scmp.eq.s32.totalorder %s21, 0
      %p69 = por %p67, %p68
      %s71 = sadd.s32 %s70, 1
      %p74 = scmp.eq.s32.totalorder %s15, 1
      %p75 = scmp.ne.s32.totalorder %s70, %s72
      %p76 = scmp.eq.s32.totalorder %s15, 0
      %p77 = por %p75, %p76
      %p78 = scmp.ne.s32.totalorder %s70, %s72
      %p79 = scmp.eq.s32.totalorder %s20, 1
      %p80 = por %p78, %p79
      %p81 = scmp.ne.s32.totalorder %s72, %s73
      %p82 = scmp.eq.s32.totalorder %s20, 0
      %p83 = por %p81, %p82
      %p84 = scmp.ne.s32.totalorder %s72, %s73
      %p85 = scmp.eq.s32.totalorder %s21, 1
      %p86 = por %p84, %p85
      %p88 = scmp.ne.s32.totalorder %s73, %s87
      %p89 = scmp.eq.s32.totalorder %s21, 0
      %p90 = por %p88, %p89
      %s91 = ssub.s32 %s15, %s22
      %p92 = scmp.eq.s32.totalorder %s91, 0
      %s94 = sadd.s32 %s93, 1
      %s95 = scalar_select %p92, %s93, %s94
      %p98 = pneg %p92
      %p99 = scmp.eq.s32.totalorder %s15, 1
      %p100 = por %p98, %p99
      %p101 = scmp.ne.s32.totalorder %s93, %s96
      %p102 = scmp.eq.s32.totalorder %s15, 0
      %p103 = por %p101, %p102
      %p104 = scmp.ne.s32.totalorder %s93, %s96
      %p105 = scmp.eq.s32.totalorder %s20, 1
      %p106 = por %p104, %p105
      %p107 = scmp.ne.s32.totalorder %s96, %s97
      %p108 = scmp.eq.s32.totalorder %s20, 0
      %p109 = por %p107, %p108
      %p110 = scmp.ne.s32.totalorder %s96, %s97
      %p111 = scmp.eq.s32.totalorder %s21, 1
      %p112 = por %p110, %p111
      %p114 = scmp.ne.s32.totalorder %s97, %s113
      %p115 = scmp.eq.s32.totalorder %s21, 0
      %p116 = por %p114, %p115
      %p117 = scmp.le.s32.totalorder 1, %s15
      %p118 = scmp.lt.s32.totalorder %s15, 3
      %p119 = pnand %p117, %p118
      %p120 = pneg %p119
      // Predicated region
      $region9: #{tpu_custom_call.1} parent=5 // pred_check
        _
      $region10: #{tpu_custom_call.1} parent=5 // pred_check_branch
        %122 = sbr.rel (%p119) target = $region12
      $region11: #{tpu_custom_call.1} parent=5 // pred_region
        %s123 = ssub.s32 %s15, 1
        // Predicated region
        $region13: #{tpu_custom_call.1} parent=11 // pred_check
          %p124 = pneg %p62
        $region14: #{tpu_custom_call.1} parent=11 // pred_check_branch
          %126 = sbr.rel (%p124) target = $region16
        $region15: #{tpu_custom_call.1} parent=11 // pred_region
          _
        $region16: #{tpu_custom_call.1} parent=11 // pred_fallthru
          _
        // Predicated region
        $region17: #{tpu_custom_call.1} parent=11 // pred_check
          %p127 = pneg %p83
        $region18: #{tpu_custom_call.1} parent=11 // pred_check_branch
          %129 = sbr.rel (%p127) target = $region20
        $region19: #{tpu_custom_call.1} parent=11 // pred_region
          _
        $region20: #{tpu_custom_call.1} parent=11 // pred_fallthru
          _
      $region12: #{tpu_custom_call.1} parent=5 // pred_fallthru
        _
      %p130 = scmp.lt.s32.totalorder %s15, 2
      // Predicated region
      $region21: #{tpu_custom_call.1} parent=5 // pred_check
        %p131 = pneg %p130
      $region22: #{tpu_custom_call.1} parent=5 // pred_check_branch
        %133 = sbr.rel (%p131) target = $region24
      $region23: #{tpu_custom_call.1} parent=5 // pred_region
        // Predicated region
        $region25: #{tpu_custom_call.1} parent=23 // pred_check
          %p134 = pneg %p35
        $region26: #{tpu_custom_call.1} parent=23 // pred_check_branch
          %136 = sbr.rel (%p134) target = $region28
        $region27: #{tpu_custom_call.1} parent=23 // pred_region
          %s137 = sand.u32 %s25, 1
          %s138 = scalar_lea.sflag [#allocation3], %s137
          %s139 = sand.u32 %s25, 1
          %s140 = smul.addr %s139, 64
          %s141 = scalar_lea.vmem [#allocation2], %s140
          %s142 = smul.u32 4, %s15
          %s144 = ssub.s32 1024, 1024
          %145 = vsyncadd %s138, %s144
          %s146 = smul.addr %s142, 2
          %s147 = smul.addr %s146, 128
          %s148 = scalar_lea.hbm %s0, %s147
          %s149 = sshll.u32 %s141, 4
          %s150 = int_to_ptr.vmem [resolvable:$true] %s149
          %155 = dma.hbm_to_vmem [thread:$0]  %s148, 1024, %s150, %s138, 128, 128, 8
        $region28: #{tpu_custom_call.1} parent=23 // pred_fallthru
          _
      $region24: #{tpu_custom_call.1} parent=5 // pred_fallthru
        _
      %p156 = scmp.le.s32.totalorder 1, %s15
      %p157 = scmp.lt.s32.totalorder %s15, 3
      %p158 = pnand %p156, %p157
      %p159 = pneg %p158
      // Predicated region
      $region29: #{tpu_custom_call.1} parent=5 // pred_check
        _
      $region30: #{tpu_custom_call.1} parent=5 // pred_check_branch
        %161 = sbr.rel (%p158) target = $region32
      $region31: #{tpu_custom_call.1} parent=5 // pred_region
        %s162 = ssub.s32 %s15, 1
        %s163 = sand.u32 %s28, 1
        %s164 = scalar_lea.sflag [#allocation3], %s163
        %s165 = sand.u32 %s28, 1
        %s166 = smul.addr %s165, 64
        %s167 = scalar_lea.vmem [#allocation2], %s166
        // Predicated region
        $region33: #{tpu_custom_call.1} parent=31 // pred_check
          %p168 = pneg %p41
        $region34: #{tpu_custom_call.1} parent=31 // pred_check_branch
          %170 = sbr.rel (%p168) target = $region36
        $region35: #{tpu_custom_call.1} parent=31 // pred_region
          %171 = dma.done %s164, 1024
        $region36: #{tpu_custom_call.1} parent=31 // pred_fallthru
          _
        %s172 = sand.u32 %s28, 1
        %s173 = scalar_lea.sflag [#allocation3], %s172
        %s174 = sand.u32 %s28, 1
        %s175 = smul.addr %s174, 64
        %s176 = scalar_lea.vmem [#allocation2], %s175
        %p177 = pneg %p41
        %p178 = pneg %p38
        %p179 = pneg %p62
        %p180 = pneg %p59
        %p181 = pneg %p83
        %p182 = pneg %p80
        %p183 = pneg %p109
        %p184 = pneg %p106
        %s185 = sand.u32 %s96, 1
        %s186 = scalar_lea.sflag [#allocation4], %s185
        %s187 = sand.u32 %s96, 1
        %s188 = smul.addr %s187, 64
        %s189 = scalar_lea.vmem [#allocation5], %s188
        %s190 = smul.u32 4, %s20
        %s191 = smul.u32 4, %s20
        %s192 = smul.u32 %s20, 4
        %s193 = scalar_lea.vmem %s1, %s192
        %v194 = vld [vmem:[%s193] sm:$0xf]
        %s195 = scalar_lea.vmem %s2, %s192
        %v196 = vld [vmem:[%s195] sm:$0xf]
        %v197 = vld [vmem:[%s167] sm:$0xff]
        %v198 = vld [vmem:[%s167 + $0x10] sm:$0xff]
        %v199 = vld [vmem:[%s167 + $0x20] sm:$0xff]
        %v200 = vld [vmem:[%s167 + $0x30] sm:$0xff]
        %vm201 = vcmask 64512
        %v202 = vsel %vm201, %v197, 0.0
        %203 = vadd.xlane.f32.xlu0 %v202
        %v204 = vpop.xlane.xlu0 %203
        %v205 = vsel %vm201, %v198, 0.0
        %206 = vadd.xlane.f32.xlu0 %v205
        %v207 = vpop.xlane.xlu0 %206
        %v208 = vsel %vm201, %v199, 0.0
        %209 = vadd.xlane.f32.xlu0 %v208
        %v210 = vpop.xlane.xlu0 %209
        %v211 = vsel %vm201, %v200, 0.0
        %212 = vadd.xlane.f32.xlu0 %v211
        %v213 = vpop.xlane.xlu0 %212
        %v214 = vrot.slane %v204, 4
        %v215 = vadd.f32 %v204, %v214
        %v216 = vrot.slane %v215, 2
        %v217 = vadd.f32 %v215, %v216
        %v218 = vrot.slane %v217, 1
        %v219 = vadd.f32 %v217, %v218
        %v220 = vrot.slane %v207, 4
        %v221 = vadd.f32 %v207, %v220
        %v222 = vrot.slane %v221, 2
        %v223 = vadd.f32 %v221, %v222
        %v224 = vrot.slane %v223, 1
        %v225 = vadd.f32 %v223, %v224
        %v226 = vrot.slane %v210, 4
        %v227 = vadd.f32 %v210, %v226
        %v228 = vrot.slane %v227, 2
        %v229 = vadd.f32 %v227, %v228
        %v230 = vrot.slane %v229, 1
        %v231 = vadd.f32 %v229, %v230
        %v232 = vrot.slane %v213, 4
        %v233 = vadd.f32 %v213, %v232
        %v234 = vrot.slane %v233, 2
        %v235 = vadd.f32 %v233, %v234
        %v236 = vrot.slane %v235, 1
        %v237 = vadd.f32 %v235, %v236
        %v238 = vmul.f32 %v219, 0.015625
        %v239 = vmul.f32 %v225, 0.015625
        %v240 = vmul.f32 %v231, 0.015625
        %v241 = vmul.f32 %v237, 0.015625
        %v244 = vunpack.c.l.s4 1966171168
        %v245 = vunpack.c.0.s8 %v244
        %v246 = vlaneseq
        %v247 = vshrl.u32 %v246, 7
        %v248 = vsub.s32 %v245, %v247
        %v249 = vrot.slane %v194, %v248
        %v250 = vcombine.high %v249, %v249
        %v252 = vunpack.c.l.s4 1966171168
        %v253 = vunpack.c.0.s8 %v252
        %v254 = vlaneseq
        %v255 = vshrl.u32 %v254, 7
        %v256 = vsub.s32 %v253, %v255
        %v257 = vrot.slane %v249, %v256
        %v259 = vunpack.c.l.s4 1966171168
        %v260 = vunpack.c.0.s8 %v259
        %v261 = vlaneseq
        %v262 = vshrl.u32 %v261, 7
        %v263 = vsub.s32 %v260, %v262
        %v264 = vrot.slane %v250, %v263
        %v265 = vcombine.high %v257, %v257
        %v266 = vcombine.high %v264, %v264
        %v269 = vunpack.c.l.s4 1966171168
        %v270 = vunpack.c.0.s8 %v269
        %v271 = vlaneseq
        %v272 = vshrl.u32 %v271, 7
        %v273 = vsub.s32 %v270, %v272
        %v274 = vrot.slane %v196, %v273
        %v275 = vcombine.high %v274, %v274
        %v277 = vunpack.c.l.s4 1966171168
        %v278 = vunpack.c.0.s8 %v277
        %v279 = vlaneseq
        %v280 = vshrl.u32 %v279, 7
        %v281 = vsub.s32 %v278, %v280
        %v282 = vrot.slane %v274, %v281
        %v284 = vunpack.c.l.s4 1966171168
        %v285 = vunpack.c.0.s8 %v284
        %v286 = vlaneseq
        %v287 = vshrl.u32 %v286, 7
        %v288 = vsub.s32 %v285, %v287
        %v289 = vrot.slane %v275, %v288
        %v290 = vcombine.high %v282, %v282
        %v291 = vcombine.high %v289, %v289
        %v296 = vsub.f32 %v197, %v238
        %v297 = vsub.f32 %v198, %v239
        %v298 = vsub.f32 %v199, %v240
        %v299 = vsub.f32 %v200, %v241
        %v300 = vlaneseq
        %v301 = vshrl.u32 %v300, 7
        %v302 = vsub.s32 0, %v301
        %v303 = vrot.slane %v257, %v302
        %v304 = vlaneseq
        %v305 = vshrl.u32 %v304, 7
        %v306 = vsub.s32 0, %v305
        %v307 = vrot.slane %v264, %v306
        %v308 = vlaneseq
        %v309 = vshrl.u32 %v308, 7
        %v310 = vsub.s32 0, %v309
        %v311 = vrot.slane %v265, %v310
        %v312 = vlaneseq
        %v313 = vshrl.u32 %v312, 7
        %v314 = vsub.s32 0, %v313
        %v315 = vrot.slane %v266, %v314
        %316 = vset.pattern.permute.xlu0 0
        %317 = vperm.xlu0 %316, %v303
        %v318 = vpop.permute.xlu0 %317
        %320 = vset.pattern.permute.xlu0 0
        %321 = vperm.xlu0 %320, %v307
        %v322 = vpop.permute.xlu0 %321
        %324 = vset.pattern.permute.xlu0 0
        %325 = vperm.xlu0 %324, %v311
        %v326 = vpop.permute.xlu0 %325
        %328 = vset.pattern.permute.xlu0 0
        %329 = vperm.xlu0 %328, %v315
        %v330 = vpop.permute.xlu0 %329
        %v332 = vmul.f32 %v296, %v318
        %v333 = vmul.f32 %v297, %v322
        %v334 = vmul.f32 %v298, %v326
        %v335 = vmul.f32 %v299, %v330
        %v336 = vmul.f32 %v238, %v282
        %v337 = vmul.f32 %v239, %v289
        %v338 = vmul.f32 %v240, %v290
        %v339 = vmul.f32 %v241, %v291
        %v344 = vlaneseq
        %v345 = vshrl.u32 %v344, 7
        %v346 = vsub.s32 0, %v345
        %v347 = vrot.slane %v336, %v346
        %v348 = vlaneseq
        %v349 = vshrl.u32 %v348, 7
        %v350 = vsub.s32 0, %v349
        %v351 = vrot.slane %v337, %v350
        %v352 = vlaneseq
        %v353 = vshrl.u32 %v352, 7
        %v354 = vsub.s32 0, %v353
        %v355 = vrot.slane %v338, %v354
        %v356 = vlaneseq
        %v357 = vshrl.u32 %v356, 7
        %v358 = vsub.s32 0, %v357
        %v359 = vrot.slane %v339, %v358
        %360 = vset.pattern.permute.xlu0 0
        %361 = vperm.xlu0 %360, %v347
        %v362 = vpop.permute.xlu0 %361
        %364 = vset.pattern.permute.xlu0 0
        %365 = vperm.xlu0 %364, %v351
        %v366 = vpop.permute.xlu0 %365
        %368 = vset.pattern.permute.xlu0 0
        %369 = vperm.xlu0 %368, %v355
        %v370 = vpop.permute.xlu0 %369
        %372 = vset.pattern.permute.xlu0 0
        %373 = vperm.xlu0 %372, %v359
        %v374 = vpop.permute.xlu0 %373
        %v376 = vadd.f32 %v332, %v362
        %v377 = vadd.f32 %v333, %v366
        %v378 = vadd.f32 %v334, %v370
        %v379 = vadd.f32 %v335, %v374
        %380 = vst.msk [vmem:[%s189] sm:$0xff] %vm201, %v376
        %381 = vst.msk [vmem:[%s189 + $0x10] sm:$0xff] %vm201, %v377
        %382 = vst.msk [vmem:[%s189 + $0x20] sm:$0xff] %vm201, %v378
        %383 = vst.msk [vmem:[%s189 + $0x30] sm:$0xff] %vm201, %v379
        %v384 = vld [vmem:[%s167] sm:$0xff]
        %v385 = vld [vmem:[%s167 + $0x10] sm:$0xff]
        %v386 = vld [vmem:[%s167 + $0x20] sm:$0xff]
        %v387 = vld [vmem:[%s167 + $0x30] sm:$0xff]
        %392 = vrot.lane.b32.xlu0 %v384, 120
        %v393 = vpop.permute.xlu0 %392
        %394 = vrot.lane.b32.xlu0 %v385, 120
        %v395 = vpop.permute.xlu0 %394
        %396 = vrot.lane.b32.xlu0 %v386, 120
        %v397 = vpop.permute.xlu0 %396
        %398 = vrot.lane.b32.xlu0 %v387, 120
        %v399 = vpop.permute.xlu0 %398
        %v404 = vsel %vm201, %v393, 0.0
        %405 = vadd.xlane.f32.xlu0 %v404
        %v406 = vpop.xlane.xlu0 %405
        %v407 = vsel %vm201, %v395, 0.0
        %408 = vadd.xlane.f32.xlu0 %v407
        %v409 = vpop.xlane.xlu0 %408
        %v410 = vsel %vm201, %v397, 0.0
        %411 = vadd.xlane.f32.xlu0 %v410
        %v412 = vpop.xlane.xlu0 %411
        %v413 = vsel %vm201, %v399, 0.0
        %414 = vadd.xlane.f32.xlu0 %v413
        %v415 = vpop.xlane.xlu0 %414
        %v416 = vrot.slane %v406, 4
        %v417 = vadd.f32 %v406, %v416
        %v418 = vrot.slane %v417, 2
        %v419 = vadd.f32 %v417, %v418
        %v420 = vrot.slane %v419, 1
        %v421 = vadd.f32 %v419, %v420
        %v422 = vrot.slane %v409, 4
        %v423 = vadd.f32 %v409, %v422
        %v424 = vrot.slane %v423, 2
        %v425 = vadd.f32 %v423, %v424
        %v426 = vrot.slane %v425, 1
        %v427 = vadd.f32 %v425, %v426
        %v428 = vrot.slane %v412, 4
        %v429 = vadd.f32 %v412, %v428
        %v430 = vrot.slane %v429, 2
        %v431 = vadd.f32 %v429, %v430
        %v432 = vrot.slane %v431, 1
        %v433 = vadd.f32 %v431, %v432
        %v434 = vrot.slane %v415, 4
        %v435 = vadd.f32 %v415, %v434
        %v436 = vrot.slane %v435, 2
        %v437 = vadd.f32 %v435, %v436
        %v438 = vrot.slane %v437, 1
        %v439 = vadd.f32 %v437, %v438
        %v440 = vmul.f32 %v421, 0.015625
        %v441 = vmul.f32 %v427, 0.015625
        %v442 = vmul.f32 %v433, 0.015625
        %v443 = vmul.f32 %v439, 0.015625
        %v444 = vsub.f32 %v384, %v440
        %v445 = vsub.f32 %v385, %v441
        %v446 = vsub.f32 %v386, %v442
        %v447 = vsub.f32 %v387, %v443
        %448 = vset.pattern.permute.xlu0 1
        %449 = vperm.xlu0 %448, %v303
        %v450 = vpop.permute.xlu0 %449
        %452 = vset.pattern.permute.xlu0 1
        %453 = vperm.xlu0 %452, %v307
        %v454 = vpop.permute.xlu0 %453
        %456 = vset.pattern.permute.xlu0 1
        %457 = vperm.xlu0 %456, %v311
        %v458 = vpop.permute.xlu0 %457
        %460 = vset.pattern.permute.xlu0 1
        %461 = vperm.xlu0 %460, %v315
        %v462 = vpop.permute.xlu0 %461
        %v464 = vmul.f32 %v444, %v450
        %v465 = vmul.f32 %v445, %v454
        %v466 = vmul.f32 %v446, %v458
        %v467 = vmul.f32 %v447, %v462
        %v468 = vmul.f32 %v440, %v282
        %v469 = vmul.f32 %v441, %v289
        %v470 = vmul.f32 %v442, %v290
        %v471 = vmul.f32 %v443, %v291
        %v476 = vlaneseq
        %v477 = vshrl.u32 %v476, 7
        %v478 = vsub.s32 0, %v477
        %v479 = vrot.slane %v468, %v478
        %v480 = vlaneseq
        %v481 = vshrl.u32 %v480, 7
        %v482 = vsub.s32 0, %v481
        %v483 = vrot.slane %v469, %v482
        %v484 = vlaneseq
        %v485 = vshrl.u32 %v484, 7
        %v486 = vsub.s32 0, %v485
        %v487 = vrot.slane %v470, %v486
        %v488 = vlaneseq
        %v489 = vshrl.u32 %v488, 7
        %v490 = vsub.s32 0, %v489
        %v491 = vrot.slane %v471, %v490
        %492 = vset.pattern.permute.xlu0 1
        %493 = vperm.xlu0 %492, %v479
        %v494 = vpop.permute.xlu0 %493
        %496 = vset.pattern.permute.xlu0 1
        %497 = vperm.xlu0 %496, %v483
        %v498 = vpop.permute.xlu0 %497
        %500 = vset.pattern.permute.xlu0 1
        %501 = vperm.xlu0 %500, %v487
        %v502 = vpop.permute.xlu0 %501
        %504 = vset.pattern.permute.xlu0 1
        %505 = vperm.xlu0 %504, %v491
        %v506 = vpop.permute.xlu0 %505
        %v508 = vadd.f32 %v464, %v494
        %v509 = vadd.f32 %v465, %v498
        %v510 = vadd.f32 %v466, %v502
        %v511 = vadd.f32 %v467, %v506
        %vm512 = vcmask 130112
        %513 = vst.msk [vmem:[%s189] sm:$0xff] %vm512, %v508
        %514 = vst.msk [vmem:[%s189 + $0x10] sm:$0xff] %vm512, %v509
        %515 = vst.msk [vmem:[%s189 + $0x20] sm:$0xff] %vm512, %v510
        %516 = vst.msk [vmem:[%s189 + $0x30] sm:$0xff] %vm512, %v511
        %v517 = vld [vmem:[%s167 + $0x8] sm:$0xff]
        %v518 = vld [vmem:[%s167 + $0x18] sm:$0xff]
        %v519 = vld [vmem:[%s167 + $0x28] sm:$0xff]
        %v520 = vld [vmem:[%s167 + $0x38] sm:$0xff]
        %v521 = vsel %vm201, %v517, 0.0
        %522 = vadd.xlane.f32.xlu0 %v521
        %v523 = vpop.xlane.xlu0 %522
        %v524 = vsel %vm201, %v518, 0.0
        %525 = vadd.xlane.f32.xlu0 %v524
        %v526 = vpop.xlane.xlu0 %525
        %v527 = vsel %vm201, %v519, 0.0
        %528 = vadd.xlane.f32.xlu0 %v527
        %v529 = vpop.xlane.xlu0 %528
        %v530 = vsel %vm201, %v520, 0.0
        %531 = vadd.xlane.f32.xlu0 %v530
        %v532 = vpop.xlane.xlu0 %531
        %v533 = vrot.slane %v523, 4
        %v534 = vadd.f32 %v523, %v533
        %v535 = vrot.slane %v534, 2
        %v536 = vadd.f32 %v534, %v535
        %v537 = vrot.slane %v536, 1
        %v538 = vadd.f32 %v536, %v537
        %v539 = vrot.slane %v526, 4
        %v540 = vadd.f32 %v526, %v539
        %v541 = vrot.slane %v540, 2
        %v542 = vadd.f32 %v540, %v541
        %v543 = vrot.slane %v542, 1
        %v544 = vadd.f32 %v542, %v543
        %v545 = vrot.slane %v529, 4
        %v546 = vadd.f32 %v529, %v545
        %v547 = vrot.slane %v546, 2
        %v548 = vadd.f32 %v546, %v547
        %v549 = vrot.slane %v548, 1
        %v550 = vadd.f32 %v548, %v549
        %v551 = vrot.slane %v532, 4
        %v552 = vadd.f32 %v532, %v551
        %v553 = vrot.slane %v552, 2
        %v554 = vadd.f32 %v552, %v553
        %v555 = vrot.slane %v554, 1
        %v556 = vadd.f32 %v554, %v555
        %v557 = vmul.f32 %v538, 0.015625
        %v558 = vmul.f32 %v544, 0.015625
        %v559 = vmul.f32 %v550, 0.015625
        %v560 = vmul.f32 %v556, 0.015625
        %v561 = vsub.f32 %v517, %v557
        %v562 = vsub.f32 %v518, %v558
        %v563 = vsub.f32 %v519, %v559
        %v564 = vsub.f32 %v520, %v560
        %565 = vset.pattern.permute.xlu0 2
        %566 = vperm.xlu0 %565, %v303
        %v567 = vpop.permute.xlu0 %566
        %569 = vset.pattern.permute.xlu0 2
        %570 = vperm.xlu0 %569, %v307
        %v571 = vpop.permute.xlu0 %570
        %573 = vset.pattern.permute.xlu0 2
        %574 = vperm.xlu0 %573, %v311
        %v575 = vpop.permute.xlu0 %574
        %577 = vset.pattern.permute.xlu0 2
        %578 = vperm.xlu0 %577, %v315
        %v579 = vpop.permute.xlu0 %578
        %v581 = vmul.f32 %v561, %v567
        %v582 = vmul.f32 %v562, %v571
        %v583 = vmul.f32 %v563, %v575
        %v584 = vmul.f32 %v564, %v579
        %v585 = vmul.f32 %v557, %v282
        %v586 = vmul.f32 %v558, %v289
        %v587 = vmul.f32 %v559, %v290
        %v588 = vmul.f32 %v560, %v291
        %v593 = vlaneseq
        %v594 = vshrl.u32 %v593, 7
        %v595 = vsub.s32 0, %v594
        %v596 = vrot.slane %v585, %v595
        %v597 = vlaneseq
        %v598 = vshrl.u32 %v597, 7
        %v599 = vsub.s32 0, %v598
        %v600 = vrot.slane %v586, %v599
        %v601 = vlaneseq
        %v602 = vshrl.u32 %v601, 7
        %v603 = vsub.s32 0, %v602
        %v604 = vrot.slane %v587, %v603
        %v605 = vlaneseq
        %v606 = vshrl.u32 %v605, 7
        %v607 = vsub.s32 0, %v606
        %v608 = vrot.slane %v588, %v607
        %609 = vset.pattern.permute.xlu0 2
        %610 = vperm.xlu0 %609, %v596
        %v611 = vpop.permute.xlu0 %610
        %613 = vset.pattern.permute.xlu0 2
        %614 = vperm.xlu0 %613, %v600
        %v615 = vpop.permute.xlu0 %614
        %617 = vset.pattern.permute.xlu0 2
        %618 = vperm.xlu0 %617, %v604
        %v619 = vpop.permute.xlu0 %618
        %621 = vset.pattern.permute.xlu0 2
        %622 = vperm.xlu0 %621, %v608
        %v623 = vpop.permute.xlu0 %622
        %v625 = vadd.f32 %v581, %v611
        %v626 = vadd.f32 %v582, %v615
        %v627 = vadd.f32 %v583, %v619
        %v628 = vadd.f32 %v584, %v623
        %629 = vst.msk [vmem:[%s189 + $0x8] sm:$0xff] %vm201, %v625
        %630 = vst.msk [vmem:[%s189 + $0x18] sm:$0xff] %vm201, %v626
        %631 = vst.msk [vmem:[%s189 + $0x28] sm:$0xff] %vm201, %v627
        %632 = vst.msk [vmem:[%s189 + $0x38] sm:$0xff] %vm201, %v628
        %v633 = vld [vmem:[%s167 + $0x8] sm:$0xff]
        %v634 = vld [vmem:[%s167 + $0x18] sm:$0xff]
        %v635 = vld [vmem:[%s167 + $0x28] sm:$0xff]
        %v636 = vld [vmem:[%s167 + $0x38] sm:$0xff]
        %641 = vrot.lane.b32.xlu0 %v633, 120
        %v642 = vpop.permute.xlu0 %641
        %643 = vrot.lane.b32.xlu0 %v634, 120
        %v644 = vpop.permute.xlu0 %643
        %645 = vrot.lane.b32.xlu0 %v635, 120
        %v646 = vpop.permute.xlu0 %645
        %647 = vrot.lane.b32.xlu0 %v636, 120
        %v648 = vpop.permute.xlu0 %647
        %v653 = vsel %vm201, %v642, 0.0
        %654 = vadd.xlane.f32.xlu0 %v653
        %v655 = vpop.xlane.xlu0 %654
        %v656 = vsel %vm201, %v644, 0.0
        %657 = vadd.xlane.f32.xlu0 %v656
        %v658 = vpop.xlane.xlu0 %657
        %v659 = vsel %vm201, %v646, 0.0
        %660 = vadd.xlane.f32.xlu0 %v659
        %v661 = vpop.xlane.xlu0 %660
        %v662 = vsel %vm201, %v648, 0.0
        %663 = vadd.xlane.f32.xlu0 %v662
        %v664 = vpop.xlane.xlu0 %663
        %v665 = vrot.slane %v655, 4
        %v666 = vadd.f32 %v655, %v665
        %v667 = vrot.slane %v666, 2
        %v668 = vadd.f32 %v666, %v667
        %v669 = vrot.slane %v668, 1
        %v670 = vadd.f32 %v668, %v669
        %v671 = vrot.slane %v658, 4
        %v672 = vadd.f32 %v658, %v671
        %v673 = vrot.slane %v672, 2
        %v674 = vadd.f32 %v672, %v673
        %v675 = vrot.slane %v674, 1
        %v676 = vadd.f32 %v674, %v675
        %v677 = vrot.slane %v661, 4
        %v678 = vadd.f32 %v661, %v677
        %v679 = vrot.slane %v678, 2
        %v680 = vadd.f32 %v678, %v679
        %v681 = vrot.slane %v680, 1
        %v682 = vadd.f32 %v680, %v681
        %v683 = vrot.slane %v664, 4
        %v684 = vadd.f32 %v664, %v683
        %v685 = vrot.slane %v684, 2
        %v686 = vadd.f32 %v684, %v685
        %v687 = vrot.slane %v686, 1
        %v688 = vadd.f32 %v686, %v687
        %v689 = vmul.f32 %v670, 0.015625
        %v690 = vmul.f32 %v676, 0.015625
        %v691 = vmul.f32 %v682, 0.015625
        %v692 = vmul.f32 %v688, 0.015625
        %v693 = vsub.f32 %v633, %v689
        %v694 = vsub.f32 %v634, %v690
        %v695 = vsub.f32 %v635, %v691
        %v696 = vsub.f32 %v636, %v692
        %697 = vset.pattern.permute.xlu0 3
        %698 = vperm.xlu0 %697, %v303
        %v699 = vpop.permute.xlu0 %698
        %701 = vset.pattern.permute.xlu0 3
        %702 = vperm.xlu0 %701, %v307
        %v703 = vpop.permute.xlu0 %702
        %705 = vset.pattern.permute.xlu0 3
        %706 = vperm.xlu0 %705, %v311
        %v707 = vpop.permute.xlu0 %706
        %709 = vset.pattern.permute.xlu0 3
        %710 = vperm.xlu0 %709, %v315
        %v711 = vpop.permute.xlu0 %710
        %v713 = vmul.f32 %v693, %v699
        %v714 = vmul.f32 %v694, %v703
        %v715 = vmul.f32 %v695, %v707
        %v716 = vmul.f32 %v696, %v711
        %v717 = vmul.f32 %v689, %v282
        %v718 = vmul.f32 %v690, %v289
        %v719 = vmul.f32 %v691, %v290
        %v720 = vmul.f32 %v692, %v291
        %v725 = vlaneseq
        %v726 = vshrl.u32 %v725, 7
        %v727 = vsub.s32 0, %v726
        %v728 = vrot.slane %v717, %v727
        %v729 = vlaneseq
        %v730 = vshrl.u32 %v729, 7
        %v731 = vsub.s32 0, %v730
        %v732 = vrot.slane %v718, %v731
        %v733 = vlaneseq
        %v734 = vshrl.u32 %v733, 7
        %v735 = vsub.s32 0, %v734
        %v736 = vrot.slane %v719, %v735
        %v737 = vlaneseq
        %v738 = vshrl.u32 %v737, 7
        %v739 = vsub.s32 0, %v738
        %v740 = vrot.slane %v720, %v739
        %741 = vset.pattern.permute.xlu0 3
        %742 = vperm.xlu0 %741, %v728
        %v743 = vpop.permute.xlu0 %742
        %745 = vset.pattern.permute.xlu0 3
        %746 = vperm.xlu0 %745, %v732
        %v747 = vpop.permute.xlu0 %746
        %749 = vset.pattern.permute.xlu0 3
        %750 = vperm.xlu0 %749, %v736
        %v751 = vpop.permute.xlu0 %750
        %753 = vset.pattern.permute.xlu0 3
        %754 = vperm.xlu0 %753, %v740
        %v755 = vpop.permute.xlu0 %754
        %v757 = vadd.f32 %v713, %v743
        %v758 = vadd.f32 %v714, %v747
        %v759 = vadd.f32 %v715, %v751
        %v760 = vadd.f32 %v716, %v755
        %761 = vst.msk [vmem:[%s189 + $0x8] sm:$0xff] %vm512, %v757
        %762 = vst.msk [vmem:[%s189 + $0x18] sm:$0xff] %vm512, %v758
        %763 = vst.msk [vmem:[%s189 + $0x28] sm:$0xff] %vm512, %v759
        %764 = vst.msk [vmem:[%s189 + $0x38] sm:$0xff] %vm512, %v760
        %s765 = sand.u32 %s96, 1
        %s766 = scalar_lea.sflag [#allocation4], %s765
        %s767 = sand.u32 %s96, 1
        %s768 = smul.addr %s767, 64
        %s769 = scalar_lea.vmem [#allocation5], %s768
        // Predicated region
        $region37: #{tpu_custom_call.1} parent=31 // pred_check
          %p770 = pneg %p106
        $region38: #{tpu_custom_call.1} parent=31 // pred_check_branch
          %772 = sbr.rel (%p770) target = $region40
        $region39: #{tpu_custom_call.1} parent=31 // pred_region
          %s773 = smul.u32 4, %s20
          %s775 = ssub.s32 1024, 1024
          %776 = vsyncadd %s766, %s775
          %s777 = smul.addr %s773, 2
          %s778 = smul.addr %s777, 128
          %s779 = scalar_lea.hbm %s3, %s778
          %s780 = sshll.u32 %s769, 4
          %s781 = int_to_ptr.vmem [resolvable:$true] %s780
          %786 = dma.vmem_to_hbm [thread:$0]  %s781, 1024, %s779, %s766, 128, 128, 8
        $region40: #{tpu_custom_call.1} parent=31 // pred_fallthru
          _
      $region32: #{tpu_custom_call.1} parent=5 // pred_fallthru
        _
      %p787 = scmp.le.s32.totalorder 2, %s15
      // Predicated region
      $region41: #{tpu_custom_call.1} parent=5 // pred_check
        %p788 = pneg %p787
      $region42: #{tpu_custom_call.1} parent=5 // pred_check_branch
        %790 = sbr.rel (%p788) target = $region44
      $region43: #{tpu_custom_call.1} parent=5 // pred_region
        %s791 = ssub.s32 %s15, 2
        // Predicated region
        $region45: #{tpu_custom_call.1} parent=43 // pred_check
          %p792 = pneg %p112
        $region46: #{tpu_custom_call.1} parent=43 // pred_check_branch
          %794 = sbr.rel (%p792) target = $region48
        $region47: #{tpu_custom_call.1} parent=43 // pred_region
          %s795 = sand.u32 %s97, 1
          %s796 = scalar_lea.sflag [#allocation4], %s795
          %s797 = sand.u32 %s97, 1
          %s798 = smul.addr %s797, 64
          %s799 = scalar_lea.vmem [#allocation5], %s798
          %800 = dma.done %s796, 1024
        $region48: #{tpu_custom_call.1} parent=43 // pred_fallthru
          _
      $region44: #{tpu_custom_call.1} parent=5 // pred_fallthru
        _
    $region6: #{tpu_custom_call.1} parent=1 // loop_footer
      %s19 = sadd.s32 1, %s15
    $region7: #{tpu_custom_call.1} parent=1 // loop_footer_branch
      %14 = sbr.rel target = $region3
    $region8: #{tpu_custom_call.1} parent=1 // loop_exit
      _
    %801 = vsyncpa [#allocation3], 1
    %s802 = scalar_lea.sflag [#allocation3], 1
    %803 = vsyncpa %s802, 1
    %804 = vsyncpa [#allocation4], 1
    %s805 = scalar_lea.sflag [#allocation4], 1
    %806 = vsyncpa %s805, 1

</llo_original>
